<compile_context>
chip_gen: v5e
topology: v5e:2x2
jax: 0.10.0
libtpu: 0.0.40
codegen_flags: <defaults>
</compile_context>

<pallas_src>
import jax
import jax.numpy as jnp
import numpy as np
from jax.experimental import pallas as pl
from jax.experimental.pallas import tpu as pltpu


def _round_up(a, b):
    return (a + b - 1) // b * b


# --------------------------------------------------------------------------------------
# generation-aware defaults
# --------------------------------------------------------------------------------------
_TPU_VMEM_CAP_CACHE = [None]


def _vmem_capacity_bytes():
    if _TPU_VMEM_CAP_CACHE[0] is None:
        try:
            _TPU_VMEM_CAP_CACHE[0] = int(pltpu.get_tpu_info().vmem_capacity_bytes)
        except Exception:
            # Conservative fallback (v7x has 64 MiB per TensorCore).
            _TPU_VMEM_CAP_CACHE[0] = 64 * 1024 * 1024
    return _TPU_VMEM_CAP_CACHE[0]


def _default_tile_and_vmem():
    cap = _vmem_capacity_bytes()
    if cap >= 100 * 1024 * 1024:          # v5e / v6e: 128 MiB physical VMEM
        return 1024, 96 * 1024 * 1024
    return 512, 48 * 1024 * 1024          # v7x: 64 MiB per TensorCore


def _pick_m_tiling(M, tm_target, *, min_tiles=1):
    """Balanced M tiling: minimize padded rows instead of padding M up to k*tm."""
    n_min = max(min_tiles, -(-M // tm_target))
    best = None
    for n in range(n_min, n_min + 4):
        tm_c = _round_up(-(-M // n), 128)
        mpad = n * tm_c
        if best is None or mpad < best[0]:
            best = (mpad, n, tm_c)
    return best  # (Mpad, n_tiles, tm_eff)


# --------------------------------------------------------------------------------------
# kernels
# --------------------------------------------------------------------------------------
def _fused_gemm_bn_relu_kernel(a_ref, b_ref, scale_ref, shift_ref, o_ref):
    # a_ref    : (tm, Kf)   bf16  concatenated-tap input panel (taps folded into K)
    # b_ref    : (Kf, Np)   bf16  concatenated-tap weight slab (raw weights)
    # scale_ref: (1, Np)    f32   gamma * rsqrt(var + eps), tiled over the 4 phases
    # shift_ref: (1, Np)    f32   (bias - mean) * scale + beta, tiled over the 4 phases
    # o_ref    : (tm, Np)   lane-dense output slab (4 stride-2 phases packed into N)
    acc = jnp.dot(a_ref[...], b_ref[...], preferred_element_type=jnp.float32)
    o_ref[...] = jnp.maximum(acc * scale_ref[...] + shift_ref[...], 0.0
                             ).astype(o_ref.dtype)


def _fused_gemm_bn_relu_acc_kernel(a_ref, b_ref, scale_ref, shift_ref, o_ref, acc_ref):
    # K-reduction variant; only used when 4*Cin_pad > max_tk (never for CenterNet's
    # shipping layer shapes, Cin <= 512).
    k = pl.program_id(1)

    @pl.when(k == 0)
    def _init():
        acc_ref[...] = jnp.zeros_like(acc_ref)

    acc_ref[...] += jnp.dot(a_ref[...], b_ref[...], preferred_element_type=jnp.float32)

    @pl.when(k == pl.num_programs(1) - 1)
    def _finalize():
        o_ref[...] = jnp.maximum(
            acc_ref[...] * scale_ref[...] + shift_ref[...], 0.0).astype(o_ref.dtype)


# --------------------------------------------------------------------------------------
# DeconvBlock forward (NHWC)
# --------------------------------------------------------------------------------------
def deconv_block_nhwc(x, w_t, bias, gamma, beta, r_mean, r_var,
                      *, eps=1e-5, tm=None, max_tk=2048, vmem_limit_bytes=None,
                      out_dtype=jnp.float32):
    """DeconvBlock forward in NHWC: ConvTranspose2d(k=4, s=2, p=1) + eval-BN + ReLU.

    Sub-pixel / phase decomposition of the stride-2 transposed conv:
        y[2r-ph_h, 2c-ph_w, co] = sum_{dh,dw in {0,1}} sum_ci
            x_pad[r+dh, c+dw, ci] * W_t[ci, co, (3-ph_h)-2*dh, (3-ph_w)-2*dw]
    i.e. a single dense GEMM  A:(N*(H+1)*(W+1), 4*Cin) @ B:(4*Cin, 4*Cout)  with zero
    structural-zero MACs; the 4 output phases are packed (lane-dense) into the GEMM N.
    """
    N, H, W, Cin = x.shape
    Cin_w, Cout, K, K2 = w_t.shape
    assert Cin_w == Cin and (K, K2) == (4, 4), (
        "only the CenterNet deconv config (kernel=4, stride=2, padding=1) is supported")
    assert max_tk % 128 == 0

    if tm is None or vmem_limit_bytes is None:
        d_tm, d_vmem = _default_tile_and_vmem()
        tm = d_tm if tm is None else tm
        vmem_limit_bytes = d_vmem if vmem_limit_bytes is None else vmem_limit_bytes

    Ho, Wo = 2 * H, 2 * W
    Hr, Wr = H + 1, W + 1                       # per-phase GEMM rows along H / W

    # --- fold conv bias + eval-mode BatchNorm into per-channel f32 scale / shift ---
    scale = gamma * jax.lax.rsqrt(r_var + eps)
    shift = (bias - r_mean) * scale + beta

    Np = 4 * Cout                               # 4 stride-2 output phases packed into N
    Np_pad = _round_up(Np, 128)                 # lane-dense output
    Cin_pad = _round_up(Cin, 128)
    Kf = 4 * Cin_pad                            # taps folded into the contraction dim
    if Kf <= max_tk:
        tk, nk, Kf_pad = Kf, 1, Kf
    else:
        tk = max_tk
        Kf_pad = _round_up(Kf, tk)
        nk = Kf_pad // tk

    # --- weights: per tap (dh,dw), a (Cin_pad, 4*Cout) slab over the output phases;
    #     taps are concatenated along K to match A's layout.  Raw bf16 weights (BN
    #     scale is applied in the f32 epilogue). ---
    tap_slabs = []
    for dh in range(2):
        for dw in range(2):
            blocks = []
            for ph_h in range(2):
                for ph_w in range(2):
                    kh = (3 - ph_h) - 2 * dh
                    kw = (3 - ph_w) - 2 * dw
                    blocks.append(w_t[:, :, kh, kw])            # (Cin, Cout)
            slab = jnp.concatenate(blocks, axis=1)              # (Cin, 4*Cout)
            slab = jnp.pad(slab, ((0, Cin_pad - Cin), (0, Np_pad - Np)))
            tap_slabs.append(slab)
    b_mat = jnp.concatenate(tap_slabs, axis=0)                  # (Kf, Np_pad)
    b_mat = jnp.pad(b_mat, ((0, Kf_pad - Kf), (0, 0))).astype(jnp.bfloat16)

    scale_row = jnp.pad(jnp.tile(scale, 4), (0, Np_pad - Np))
    scale_row = scale_row.reshape(1, Np_pad).astype(jnp.float32)
    shift_row = jnp.pad(jnp.tile(shift, 4), (0, Np_pad - Np))
    shift_row = shift_row.reshape(1, Np_pad).astype(jnp.float32)

    # --- concatenated-K input tap panel: A[m, t*Cin_pad + ci] = x_pad[n, r+dh, c+dw, ci]
    x_pad = jnp.pad(x.astype(jnp.bfloat16),
                    ((0, 0), (1, 1), (1, 1), (0, Cin_pad - Cin)))
    M = N * Hr * Wr
    min_tiles = 2 if M > 256 else 1             # keep both v7x TCs busy on small layers
    Mpad, n_m_tiles, tm_eff = _pick_m_tiling(M, tm, min_tiles=min_tiles)

    taps = [x_pad[:, dh:dh + Hr, dw:dw + Wr, :].reshape(M, Cin_pad)
            for dh in range(2) for dw in range(2)]
    a_fused = jnp.concatenate(taps, axis=1)                     # (M, Kf)
    a_fused = jnp.pad(a_fused, ((0, Mpad - M), (0, Kf_pad - Kf)))

    if nk == 1:
        grid = (n_m_tiles,)
        in_specs = [
            pl.BlockSpec((tm_eff, tk), lambda i: (i, 0)),
            pl.BlockSpec((tk, Np_pad), lambda i: (0, 0)),
            pl.BlockSpec((1, Np_pad), lambda i: (0, 0)),
            pl.BlockSpec((1, Np_pad), lambda i: (0, 0)),
        ]
        out_specs = pl.BlockSpec((tm_eff, Np_pad), lambda i: (i, 0))
        scratch_shapes = []
        kernel = _fused_gemm_bn_relu_kernel
        dims = ("parallel",)
    else:
        grid = (n_m_tiles, nk)
        in_specs = [
            pl.BlockSpec((tm_eff, tk), lambda i, k: (i, k)),
            pl.BlockSpec((tk, Np_pad), lambda i, k: (k, 0)),
            pl.BlockSpec((1, Np_pad), lambda i, k: (0, 0)),
            pl.BlockSpec((1, Np_pad), lambda i, k: (0, 0)),
        ]
        out_specs = pl.BlockSpec((tm_eff, Np_pad), lambda i, k: (i, 0))
        scratch_shapes = [pltpu.VMEM((tm_eff, Np_pad), jnp.float32)]
        kernel = _fused_gemm_bn_relu_acc_kernel
        dims = ("parallel", "arbitrary")

    grid_spec = pltpu.PrefetchScalarGridSpec(
        num_scalar_prefetch=0,
        grid=grid,
        in_specs=in_specs,
        out_specs=out_specs,
        scratch_shapes=scratch_shapes,
    )
    p_out = pl.pallas_call(
        kernel,
        out_shape=jax.ShapeDtypeStruct((Mpad, Np_pad), out_dtype),
        grid_spec=grid_spec,
        compiler_params=pltpu.CompilerParams(
            dimension_semantics=dims,
            vmem_limit_bytes=vmem_limit_bytes),
    )(a_fused, b_mat, scale_row, shift_row)

    # --- un-pack the 4 phases back onto the (2H, 2W) output grid (pixel shuffle) ---
    p = p_out[:M, :Np].reshape(N, Hr, Wr, 2, 2, Cout)
    y_ee = p[:, :H, :W, 0, 0, :]     # (even row, even col)
    y_eo = p[:, :H, 1:, 0, 1, :]     # (even row, odd  col)
    y_oe = p[:, 1:, :W, 1, 0, :]     # (odd  row, even col)
    y_oo = p[:, 1:, 1:, 1, 1, :]     # (odd  row, odd  col)
    row_e = jnp.stack([y_ee, y_eo], axis=3).reshape(N, H, Wo, Cout)
    row_o = jnp.stack([y_oe, y_oo], axis=3).reshape(N, H, Wo, Cout)
    y = jnp.stack([row_e, row_o], axis=2).reshape(N, Ho, Wo, Cout)
    return y.astype(out_dtype)


def deconv_block_forward(x_nchw, w_t, bias, gamma, beta, r_mean, r_var,
                         *, eps=1e-5, tm=None):
    """PyTorch-layout (NCHW in / NCHW out) DeconvBlock forward."""
    x_nhwc = jnp.transpose(x_nchw, (0, 2, 3, 1))
    y = deconv_block_nhwc(x_nhwc, w_t, bias, gamma, beta, r_mean, r_var,
                          eps=eps, tm=tm, out_dtype=jnp.float32)
    return jnp.transpose(y, (0, 3, 1, 2))


def resnet_deconv_forward(x_nchw, layer_params, *, eps=1e-5, tm=None,
                          inter_dtype=jnp.bfloat16, out_dtype=jnp.float32):
    """ResnetDeconv: stacked DeconvBlocks, chained NHWC end-to-end; intermediate layers
    are kept in bf16 (half the HBM traffic), f32 only at the final model boundary."""
    x = jnp.transpose(x_nchw, (0, 2, 3, 1))
    n_layers = len(layer_params)
    for li, (w_t, bias, gamma, beta, r_mean, r_var) in enumerate(layer_params):
        layer_dtype = out_dtype if li == n_layers - 1 else inter_dtype
        x = deconv_block_nhwc(x, w_t, bias, gamma, beta, r_mean, r_var,
                              eps=eps, tm=tm, out_dtype=layer_dtype)
    return jnp.transpose(x, (0, 3, 1, 2))


# --------------------------------------------------------------------------------------
# plain-JAX reference + tests
# --------------------------------------------------------------------------------------
def _reference(x, w_t, bias, gamma, beta, r_mean, r_var,
               *, stride=2, padding=1, output_padding=0, eps=1e-5):
    """Plain-JAX scatter reference of ConvTranspose2d + eval BN + ReLU (NCHW, f32)."""
    N, Cin, H, W = x.shape
    _, Cout, K, _ = w_t.shape
    Ho = (H - 1) * stride - 2 * padding + K + output_padding
    Wo = (W - 1) * stride - 2 * padding + K + output_padding
    full_h = (H - 1) * stride + K
    full_w = (W - 1) * stride + K
    out = jnp.zeros((N, Cout, full_h + output_padding, full_w + output_padding),
                    jnp.float32)
    contrib = jnp.einsum('ncij,cokl->noijkl', x, w_t)  # (N,Cout,H,W,K,K)
    for kh in range(K):
        for kw in range(K):
            out = out.at[:, :,
                         kh:kh + (H - 1) * stride + 1:stride,
                         kw:kw + (W - 1) * stride + 1:stride].add(contrib[..., kh, kw])
    out = out[:, :, padding:padding + Ho, padding:padding + Wo]
    out = out + bias[None, :, None, None]
    out = (out - r_mean[None, :, None, None]) / jnp.sqrt(r_var[None, :, None, None] + eps)
    out = out * gamma[None, :, None, None] + beta[None, :, None, None]
    return jnp.maximum(out, 0.0)


if __name__ == "__main__":
    key = jax.random.PRNGKey(0)

    def make_block_params(k, cin, cout, kernel=4):
        kw_, kb_, kg_, kbt_, km_, kv_ = jax.random.split(k, 6)
        w_t = 0.1 * jax.random.normal(kw_, (cin, cout, kernel, kernel), jnp.float32)
        bias = 0.1 * jax.random.normal(kb_, (cout,), jnp.float32)
        gamma = 1.0 + 0.1 * jax.random.normal(kg_, (cout,), jnp.float32)
        beta = 0.1 * jax.random.normal(kbt_, (cout,), jnp.float32)
        r_mean = 0.1 * jax.random.normal(km_, (cout,), jnp.float32)
        r_var = jax.random.uniform(kv_, (cout,), jnp.float32, minval=0.5, maxval=1.5)
        return (w_t, bias, gamma, beta, r_mean, r_var)

    # ---- test 1: single DeconvBlock(4 -> 8), x: (2, 4, 16, 16) NCHW ----
    N, Cin, H, W = 2, 4, 16, 16
    Cout = 8
    kx, k1, k2 = jax.random.split(key, 3)
    x = jax.random.normal(kx, (N, Cin, H, W), jnp.float32)
    p1 = make_block_params(k1, Cin, Cout)

    out = jax.block_until_ready(jax.jit(deconv_block_forward)(x, *p1))
    ref = _reference(x, *p1, stride=2, padding=1, output_padding=0)
    assert out.shape == (N, Cout, 2 * H, 2 * W), out.shape
    # bf16 GEMM inputs (f32 accumulation) -> loosened tolerance vs the f32 reference.
    np.testing.assert_allclose(np.asarray(out), np.asarray(ref), rtol=3e-2, atol=3e-2)

    # ---- test 2: two stacked DeconvBlocks (ResnetDeconv pattern), NHWC / bf16 chained ----
    Cmid = 8
    p2 = make_block_params(k2, Cout, Cmid)
    out2 = jax.block_until_ready(jax.jit(resnet_deconv_forward)(x, [p1, p2]))
    ref2 = _reference(ref, *p2, stride=2, padding=1, output_padding=0)
    assert out2.shape == (N, Cmid, 4 * H, 4 * W), out2.shape
    np.testing.assert_allclose(np.asarray(out2), np.asarray(ref2), rtol=5e-2, atol=5e-2)

    print("KERNEL_OK")
</pallas_src>

<mosaic_0001>
module attributes {stable_mosaic.version = 11 : i64} {
  func.func @_fused_gemm_bn_relu_kernel(%arg0: i32, %arg1: memref<128x512xbf16, #tpu.memory_space<vmem>>, %arg2: memref<512x128xbf16, #tpu.memory_space<vmem>>, %arg3: memref<1x128xf32, #tpu.memory_space<vmem>>, %arg4: memref<1x128xf32, #tpu.memory_space<vmem>>, %arg5: memref<128x128xf32, #tpu.memory_space<vmem>>) attributes {dimension_semantics = [#tpu.dimension_semantics<parallel>], iteration_bounds = array<i64: 5>, scalar_prefetch = 0 : i64, scratch_operands = 0 : i64, tpu.core_type = #tpu.core_type<tc>, window_params = [{transform_indices = @transform_0, window_bounds = array<i64: 128, 512>}, {pipeline_mode = #tpu.pipeline_mode<synchronous>, transform_indices = @transform_1, window_bounds = array<i64: 512, 128>}, {pipeline_mode = #tpu.pipeline_mode<synchronous>, transform_indices = @transform_2, window_bounds = array<i64: 1, 128>}, {pipeline_mode = #tpu.pipeline_mode<synchronous>, transform_indices = @transform_3, window_bounds = array<i64: 1, 128>}, {transform_indices = @transform_4, window_bounds = array<i64: 128, 128>}]} {
    %c0 = arith.constant 0 : index
    %c0_0 = arith.constant 0 : index
    %0 = vector.load %arg1[%c0, %c0_0] : memref<128x512xbf16, #tpu.memory_space<vmem>>, vector<128x512xbf16>
    %c0_1 = arith.constant 0 : index
    %c0_2 = arith.constant 0 : index
    %1 = vector.load %arg2[%c0_1, %c0_2] : memref<512x128xbf16, #tpu.memory_space<vmem>>, vector<512x128xbf16>
    %cst = arith.constant dense<0.000000e+00> : vector<128x128xf32>
    %2 = tpu.matmul %0, %1, %cst {dimension_numbers = #tpu.dot_dimension_numbers<[1], [0], [0], [1], [0, 0, 1, 1], [], []>} : vector<128x512xbf16>, vector<512x128xbf16>, vector<128x128xf32> -> vector<128x128xf32>
    %c0_3 = arith.constant 0 : index
    %c0_4 = arith.constant 0 : index
    %3 = vector.load %arg3[%c0_3, %c0_4] : memref<1x128xf32, #tpu.memory_space<vmem>>, vector<1x128xf32>
    %4 = vector.broadcast %3 : vector<1x128xf32> to vector<128x128xf32>
    %5 = arith.mulf %2, %4 : vector<128x128xf32>
    %c0_5 = arith.constant 0 : index
    %c0_6 = arith.constant 0 : index
    %6 = vector.load %arg4[%c0_5, %c0_6] : memref<1x128xf32, #tpu.memory_space<vmem>>, vector<1x128xf32>
    %7 = vector.broadcast %6 : vector<1x128xf32> to vector<128x128xf32>
    %8 = arith.addf %5, %7 : vector<128x128xf32>
    %cst_7 = arith.constant 0.000000e+00 : f32
    %9 = vector.broadcast %cst_7 : f32 to vector<128x128xf32>
    %10 = arith.maximumf %8, %9 : vector<128x128xf32>
    %c0_8 = arith.constant 0 : index
    %c0_9 = arith.constant 0 : index
    %11 = vector.load %arg5[%c0_8, %c0_9] : memref<128x128xf32, #tpu.memory_space<vmem>>, vector<128x128xf32>
    tpu.vector_store %arg5[%c0_8, %c0_9], %10 {strides = array<i32>} : memref<128x128xf32, #tpu.memory_space<vmem>>, vector<128x128xf32>,
    return
  }
  func.func @transform_0(%arg0: i32) -> (i32, i32) {
    %c0_i32 = arith.constant 0 : i32
    %c0_i32_0 = arith.constant 0 : i32
    return %arg0, %c0_i32 : i32, i32
  }
  func.func @transform_1(%arg0: i32) -> (i32, i32) {
    %c0_i32 = arith.constant 0 : i32
    %c0_i32_0 = arith.constant 0 : i32
    %c0_i32_1 = arith.constant 0 : i32
    return %c0_i32, %c0_i32_0 : i32, i32
  }
  func.func @transform_2(%arg0: i32) -> (i32, i32) {
    %c0_i32 = arith.constant 0 : i32
    %c0_i32_0 = arith.constant 0 : i32
    %c0_i32_1 = arith.constant 0 : i32
    return %c0_i32, %c0_i32_0 : i32, i32
  }
  func.func @transform_3(%arg0: i32) -> (i32, i32) {
    %c0_i32 = arith.constant 0 : i32
    %c0_i32_0 = arith.constant 0 : i32
    %c0_i32_1 = arith.constant 0 : i32
    return %c0_i32, %c0_i32_0 : i32, i32
  }
  func.func @transform_4(%arg0: i32) -> (i32, i32) {
    %c0_i32 = arith.constant 0 : i32
    %c0_i32_0 = arith.constant 0 : i32
    return %arg0, %c0_i32 : i32, i32
  }
}

</mosaic_0001>

<llo_original>
// kernel: tile.13
$region0: #{tile.13}
  #allocation0 [shape = 's32[1]{0}', space=sflag, size = 0x4, scoped, tag = 'scoped memory for tile.13']
  %s0 = inlined_call_operand.vmem [shape: f32[8], index: 0, kind: input, shape index: {}]
  %s1 = inlined_call_operand.vmem [shape: f32[4,8], index: 1, kind: output, shape index: {}]
  // Predicated region
  $region2: #{tile.13} parent=0 // pred_check
    _
  $region3: #{tile.13} parent=0 // pred_check_branch
    %3 = sbr.rel (0) target = $region5
  $region4: #{tile.13} parent=0 // pred_region
    _
  $region5: #{tile.13} parent=0 // pred_fallthru
    _
  %v4 = vld [vmem:[%s0] ss:$0 sm:$0xff]
  %5 = vst [vmem:[%s1] sm:$0xf] %v4

// kernel: tile.14
$region0: #{tile.14}
  %s0 = inlined_call_operand.vmem [shape: f32[4,8], index: 0, kind: input, shape index: {}]
  %s1 = inlined_call_operand.vmem [shape: f32[32], index: 1, kind: output, shape index: {}]
  $region1: #{tile.14} parent=0
    #allocation0 [shape = 'u8[4096]{0}', space=vmem, size = 0x1000, scoped, tag = 'scoped mem for output reshape']
    #allocation1 [shape = 'u8[4096]{0}', space=vmem, size = 0x1000, scoped, tag = 'scoped mem for input reshape']
    %s3 = ssub.s32 16, 1
    %v4 = vld [vmem:[%s0] sm:%s3]
    %5 = vst [vmem:[#allocation1] sm:%s3] %v4
    %v6 = vld [vmem:[#allocation1] sm:$0x1]
    %vm7 = vcmask 64512
    %8 = vst.msk [vmem:[#allocation0] sm:$0x1] %vm7, %v6
    %s9 = scalar_lea.vmem [#allocation1], 3
    %v10 = vld [vmem:[%s9] sm:$0x1]
    %11 = vrot.lane.b32.xlu0 %v10, 24
    %v12 = vpop.permute.xlu0 %11
    %vm13 = vcmask 261312
    %14 = vst.msk [vmem:[#allocation0] sm:$0x1] %vm13, %v12
    %s15 = scalar_lea.vmem [#allocation1], 2
    %v16 = vld [vmem:[%s15] sm:$0x1]
    %17 = vrot.lane.b32.xlu0 %v16, 16
    %v18 = vpop.permute.xlu0 %17
    %vm19 = vcmask 195712
    %20 = vst.msk [vmem:[#allocation0] sm:$0x1] %vm19, %v18
    %s21 = scalar_lea.vmem [#allocation1], 1
    %v22 = vld [vmem:[%s21] sm:$0x1]
    %23 = vrot.lane.b32.xlu0 %v22, 8
    %v24 = vpop.permute.xlu0 %23
    %vm25 = vcmask 130112
    %26 = vst.msk [vmem:[#allocation0] sm:$0x1] %vm25, %v24
    %s28 = ssub.s32 2, 1
    %v29 = vld [vmem:[#allocation0] sm:%s28]
    %s31 = ssub.s32 2, 1
    %32 = vst [vmem:[%s1] sm:%s31] %v29

// kernel: deconv_block_forward.1
$region0: #{deconv_block_forward.1}
  #allocation0 [shape = 'u32[]', space=smem, size = 0x4, offset = 0x4, fixed_abs, tag = 'smem constant byte address 0x4 - core index']
  #allocation1 [shape = 'u32[72,128]{1,0:T(1,128)}', space=vmem, size = 0x9000, scoped, tag = 'internal scratch']
  %s0 = inlined_call_operand.vmem [shape: bf16[640,512], index: 0, kind: input, shape index: {}]
  %s1 = inlined_call_operand.vmem [shape: bf16[512,128], index: 1, kind: input, shape index: {}]
  %s2 = inlined_call_operand.vmem [shape: f32[1,128], index: 2, kind: input, shape index: {}]
  %s3 = inlined_call_operand.vmem [shape: f32[1,128], index: 3, kind: input, shape index: {}]
  %s4 = inlined_call_operand.vmem [shape: f32[640,128], index: 4, kind: output, shape index: {}]
  %s5 = sld [smem:[#allocation0]]
  $region49: #{deconv_block_forward.1} parent=0
    _
  %s7 = ssub.s32 1, %s5
  %s8 = scalar_select 0, %s7, %s5
  loop: start=0, step=1, limit=7
  $region2: #{deconv_block_forward.1} parent=0 // loop_pre_header
    _
  $region3: #{deconv_block_forward.1} parent=0 // loop_header
    %s10 = sphi 0, %s14
    %p11 = scmp.ge.s32.totalorder %s10, 7
    %s20 = sphi 0, %s22
    %s23 = sphi 0, %s20
    %s24 = sphi 0, %s23
    %s40 = sphi 0, %s24
    %s44 = sphi 0, %s44
    %s46 = sphi 0, %s44
    %s47 = sphi 0, %s46
    %s61 = sphi 0, %s47
    %s65 = sphi 0, %s65
    %s67 = sphi 0, %s65
    %s68 = sphi 0, %s67
    %s82 = sphi 0, %s68
    %s86 = sphi 0, %s86
    %s88 = sphi 0, %s86
    %s89 = sphi 0, %s88
    %s103 = sphi 0, %s89
    %s109 = sphi 0, %s111
    %s112 = sphi 0, %s109
    %s113 = sphi 0, %s112
    %s129 = sphi 0, %s113
  $region4: #{deconv_block_forward.1} parent=0 // loop_header_branch
    %13 = sbr.rel (%p11) target = $region8
  $region5: #{deconv_block_forward.1} parent=0 // loop_body
    %s15 = ssub.s32 %s10, 1
    %s16 = ssub.s32 %s10, 2
    %s17 = sadd.s32 %s10, 1
    %s18 = ssub.s32 %s10, %s17
    %p19 = scmp.eq.s32.totalorder %s18, 0
    %s21 = sadd.s32 %s20, 1
    %s22 = scalar_select %p19, %s20, %s21
    %p25 = pneg %p19
    %p26 = scmp.eq.s32.totalorder %s10, 4
    %p27 = por %p25, %p26
    %p28 = scmp.ne.s32.totalorder %s20, %s23
    %p29 = scmp.eq.s32.totalorder %s10, 0
    %p30 = por %p28, %p29
    %p31 = scmp.ne.s32.totalorder %s20, %s23
    %p32 = scmp.eq.s32.totalorder %s15, 4
    %p33 = por %p31, %p32
    %p34 = scmp.ne.s32.totalorder %s23, %s24
    %p35 = scmp.eq.s32.totalorder %s15, 0
    %p36 = por %p34, %p35
    %p37 = scmp.ne.s32.totalorder %s23, %s24
    %p38 = scmp.eq.s32.totalorder %s16, 4
    %p39 = por %p37, %p38
    %p41 = scmp.ne.s32.totalorder %s24, %s40
    %p42 = scmp.eq.s32.totalorder %s16, 0
    %p43 = por %p41, %p42
    %s45 = sadd.s32 %s44, 1
    %p48 = scmp.eq.s32.totalorder %s10, 4
    %p49 = scmp.ne.s32.totalorder %s44, %s46
    %p50 = scmp.eq.s32.totalorder %s10, 0
    %p51 = por %p49, %p50
    %p52 = scmp.ne.s32.totalorder %s44, %s46
    %p53 = scmp.eq.s32.totalorder %s15, 4
    %p54 = por %p52, %p53
    %p55 = scmp.ne.s32.totalorder %s46, %s47
    %p56 = scmp.eq.s32.totalorder %s15, 0
    %p57 = por %p55, %p56
    %p58 = scmp.ne.s32.totalorder %s46, %s47
    %p59 = scmp.eq.s32.totalorder %s16, 4
    %p60 = por %p58, %p59
    %p62 = scmp.ne.s32.totalorder %s47, %s61
    %p63 = scmp.eq.s32.totalorder %s16, 0
    %p64 = por %p62, %p63
    %s66 = sadd.s32 %s65, 1
    %p69 = scmp.eq.s32.totalorder %s10, 4
    %p70 = scmp.ne.s32.totalorder %s65, %s67
    %p71 = scmp.eq.s32.totalorder %s10, 0
    %p72 = por %p70, %p71
    %p73 = scmp.ne.s32.totalorder %s65, %s67
    %p74 = scmp.eq.s32.totalorder %s15, 4
    %p75 = por %p73, %p74
    %p76 = scmp.ne.s32.totalorder %s67, %s68
    %p77 = scmp.eq.s32.totalorder %s15, 0
    %p78 = por %p76, %p77
    %p79 = scmp.ne.s32.totalorder %s67, %s68
    %p80 = scmp.eq.s32.totalorder %s16, 4
    %p81 = por %p79, %p80
    %p83 = scmp.ne.s32.totalorder %s68, %s82
    %p84 = scmp.eq.s32.totalorder %s16, 0
    %p85 = por %p83, %p84
    %s87 = sadd.s32 %s86, 1
    %p90 = scmp.eq.s32.totalorder %s10, 4
    %p91 = scmp.ne.s32.totalorder %s86, %s88
    %p92 = scmp.eq.s32.totalorder %s10, 0
    %p93 = por %p91, %p92
    %p94 = scmp.ne.s32.totalorder %s86, %s88
    %p95 = scmp.eq.s32.totalorder %s15, 4
    %p96 = por %p94, %p95
    %p97 = scmp.ne.s32.totalorder %s88, %s89
    %p98 = scmp.eq.s32.totalorder %s15, 0
    %p99 = por %p97, %p98
    %p100 = scmp.ne.s32.totalorder %s88, %s89
    %p101 = scmp.eq.s32.totalorder %s16, 4
    %p102 = por %p100, %p101
    %p104 = scmp.ne.s32.totalorder %s89, %s103
    %p105 = scmp.eq.s32.totalorder %s16, 0
    %p106 = por %p104, %p105
    %s107 = ssub.s32 %s10, %s17
    %p108 = scmp.eq.s32.totalorder %s107, 0
    %s110 = sadd.s32 %s109, 1
    %s111 = scalar_select %p108, %s109, %s110
    %p114 = pneg %p108
    %p115 = scmp.eq.s32.totalorder %s10, 4
    %p116 = por %p114, %p115
    %p117 = scmp.ne.s32.totalorder %s109, %s112
    %p118 = scmp.eq.s32.totalorder %s10, 0
    %p119 = por %p117, %p118
    %p120 = scmp.ne.s32.totalorder %s109, %s112
    %p121 = scmp.eq.s32.totalorder %s15, 4
    %p122 = por %p120, %p121
    %p123 = scmp.ne.s32.totalorder %s112, %s113
    %p124 = scmp.eq.s32.totalorder %s15, 0
    %p125 = por %p123, %p124
    %p126 = scmp.ne.s32.totalorder %s112, %s113
    %p127 = scmp.eq.s32.totalorder %s16, 4
    %p128 = por %p126, %p127
    %p130 = scmp.ne.s32.totalorder %s113, %s129
    %p131 = scmp.eq.s32.totalorder %s16, 0
    %p132 = por %p130, %p131
    %p133 = scmp.le.s32.totalorder 1, %s10
    %p134 = scmp.lt.s32.totalorder %s10, 6
    %p135 = pnand %p133, %p134
    %p136 = pneg %p135
    // Predicated region
    $region9: #{deconv_block_forward.1} parent=5 // pred_check
      _
    $region10: #{deconv_block_forward.1} parent=5 // pred_check_branch
      %138 = sbr.rel (%p135) target = $region12
    $region11: #{deconv_block_forward.1} parent=5 // pred_region
      %s139 = ssub.s32 %s10, 1
      // Predicated region
      $region13: #{deconv_block_forward.1} parent=11 // pred_check
        %p140 = pneg %p57
      $region14: #{deconv_block_forward.1} parent=11 // pred_check_branch
        %142 = sbr.rel (%p140) target = $region16
      $region15: #{deconv_block_forward.1} parent=11 // pred_region
        _
      $region16: #{deconv_block_forward.1} parent=11 // pred_fallthru
        _
      // Predicated region
      $region17: #{deconv_block_forward.1} parent=11 // pred_check
        %p143 = pneg %p78
      $region18: #{deconv_block_forward.1} parent=11 // pred_check_branch
        %145 = sbr.rel (%p143) target = $region20
      $region19: #{deconv_block_forward.1} parent=11 // pred_region
        _
      $region20: #{deconv_block_forward.1} parent=11 // pred_fallthru
        _
      // Predicated region
      $region21: #{deconv_block_forward.1} parent=11 // pred_check
        %p146 = pneg %p99
      $region22: #{deconv_block_forward.1} parent=11 // pred_check_branch
        %148 = sbr.rel (%p146) target = $region24
      $region23: #{deconv_block_forward.1} parent=11 // pred_region
        _
      $region24: #{deconv_block_forward.1} parent=11 // pred_fallthru
        _
    $region12: #{deconv_block_forward.1} parent=5 // pred_fallthru
      _
    %p149 = scmp.lt.s32.totalorder %s10, 5
    // Predicated region
    $region25: #{deconv_block_forward.1} parent=5 // pred_check
      %p150 = pneg %p149
    $region26: #{deconv_block_forward.1} parent=5 // pred_check_branch
      %152 = sbr.rel (%p150) target = $region28
    $region27: #{deconv_block_forward.1} parent=5 // pred_region
      // Predicated region
      $region29: #{deconv_block_forward.1} parent=27 // pred_check
        %p153 = pneg %p30
      $region30: #{deconv_block_forward.1} parent=27 // pred_check_branch
        %155 = sbr.rel (%p153) target = $region32
      $region31: #{deconv_block_forward.1} parent=27 // pred_region
        %s156 = smul.u32 16, %s10
        %p157 = scmp.lt.s32.totalorder %s156, 79
        %s158 = scalar_select %p157, %s156, 79
        %s159 = smul.addr %s158, 4
        %s160 = smul.addr %s159, 4
        %s161 = scalar_lea.vmem %s0, %s160
        %s162 = smul.u32 16, %s10
      $region32: #{deconv_block_forward.1} parent=27 // pred_fallthru
        _
    $region28: #{deconv_block_forward.1} parent=5 // pred_fallthru
      _
    %p163 = scmp.le.s32.totalorder 1, %s10
    %p164 = scmp.lt.s32.totalorder %s10, 6
    %p165 = pnand %p163, %p164
    %p166 = pneg %p165
    // Predicated region
    $region33: #{deconv_block_forward.1} parent=5 // pred_check
      _
    $region34: #{deconv_block_forward.1} parent=5 // pred_check_branch
      %168 = sbr.rel (%p165) target = $region36
    $region35: #{deconv_block_forward.1} parent=5 // pred_region
      %s169 = ssub.s32 %s10, 1
      %s170 = smul.u32 16, %s15
      %p171 = scmp.lt.s32.totalorder %s170, 79
      %s172 = scalar_select %p171, %s170, 79
      %s173 = smul.addr %s172, 4
      %s174 = smul.addr %s173, 4
      %s175 = scalar_lea.vmem %s0, %s174
      %p176 = pneg %p36
      %p177 = pneg %p33
      %p178 = pneg %p57
      %p179 = pneg %p54
      %p180 = pneg %p78
      %p181 = pneg %p75
      %p182 = pneg %p99
      %p183 = pneg %p96
      %p184 = pneg %p125
      %p185 = pneg %p122
      %s186 = smul.u32 16, %s15
      %p187 = scmp.lt.s32.totalorder %s186, 79
      %s188 = scalar_select %p187, %s186, 79
      %s189 = smul.addr %s188, 8
      %s190 = scalar_lea.vmem %s4, %s189
      %s191 = smul.u32 16, %s15
      %p192 = scmp.lt.s32.totalorder %s191, 79
      %s193 = scalar_select %p192, %s191, 79
      %s194 = smul.addr %s193, 4
      %s195 = smul.addr %s194, 4
      %s196 = scalar_lea.vmem %s0, %s195
      %s197 = smul.u32 16, %s15
      %s198 = smul.u32 16, %s15
      %p199 = scmp.lt.s32.totalorder %s198, 79
      %s200 = scalar_select %p199, %s198, 79
      %s201 = smul.addr %s200, 8
      %s202 = scalar_lea.vmem %s4, %s201
      %s203 = smul.u32 16, %s15
      %v204 = vld [vmem:[%s196] sm:$0xff]
      %v205 = vld [vmem:[%s196 + $0x8] sm:$0xff]
      %v206 = vld [vmem:[%s196 + $0x10] sm:$0xff]
      %v207 = vld [vmem:[%s196 + $0x18] sm:$0xff]
      %v208 = vld [vmem:[%s196 + $0x20] sm:$0xff]
      %v209 = vld [vmem:[%s196 + $0x28] sm:$0xff]
      %v210 = vld [vmem:[%s196 + $0x30] sm:$0xff]
      %v211 = vld [vmem:[%s196 + $0x38] sm:$0xff]
      %v212 = vld [vmem:[%s196 + $0x40] sm:$0xff]
      %v213 = vld [vmem:[%s196 + $0x48] sm:$0xff]
      %v214 = vld [vmem:[%s196 + $0x50] sm:$0xff]
      %v215 = vld [vmem:[%s196 + $0x58] sm:$0xff]
      %v216 = vld [vmem:[%s196 + $0x60] sm:$0xff]
      %v217 = vld [vmem:[%s196 + $0x68] sm:$0xff]
      %v218 = vld [vmem:[%s196 + $0x70] sm:$0xff]
      %v219 = vld [vmem:[%s196 + $0x78] sm:$0xff]
      %v220 = vld [vmem:[%s196 + $0x80] sm:$0xff]
      %v221 = vld [vmem:[%s196 + $0x88] sm:$0xff]
      %v222 = vld [vmem:[%s196 + $0x90] sm:$0xff]
      %v223 = vld [vmem:[%s196 + $0x98] sm:$0xff]
      %v224 = vld [vmem:[%s196 + $0xa0] sm:$0xff]
      %v225 = vld [vmem:[%s196 + $0xa8] sm:$0xff]
      %v226 = vld [vmem:[%s196 + $0xb0] sm:$0xff]
      %v227 = vld [vmem:[%s196 + $0xb8] sm:$0xff]
      %v228 = vld [vmem:[%s196 + $0xc0] sm:$0xff]
      %v229 = vld [vmem:[%s196 + $0xc8] sm:$0xff]
      %v230 = vld [vmem:[%s196 + $0xd0] sm:$0xff]
      %v231 = vld [vmem:[%s196 + $0xd8] sm:$0xff]
      %v232 = vld [vmem:[%s196 + $0xe0] sm:$0xff]
      %v233 = vld [vmem:[%s196 + $0xe8] sm:$0xff]
      %v234 = vld [vmem:[%s196 + $0xf0] sm:$0xff]
      %v235 = vld [vmem:[%s196 + $0xf8] sm:$0xff]
      %v236 = vld [vmem:[%s1] sm:$0xf]
      %v237 = vld [vmem:[%s1 + $0x4] sm:$0xf]
      %v238 = vld [vmem:[%s1 + $0x8] sm:$0xf]
      %v239 = vld [vmem:[%s1 + $0xc] sm:$0xf]
      %v240 = vld [vmem:[%s1 + $0x10] sm:$0xf]
      %v241 = vld [vmem:[%s1 + $0x14] sm:$0xf]
      %v242 = vld [vmem:[%s1 + $0x18] sm:$0xf]
      %v243 = vld [vmem:[%s1 + $0x1c] sm:$0xf]
      %v244 = vld [vmem:[%s1 + $0x20] sm:$0xf]
      %v245 = vld [vmem:[%s1 + $0x24] sm:$0xf]
      %v246 = vld [vmem:[%s1 + $0x28] sm:$0xf]
      %v247 = vld [vmem:[%s1 + $0x2c] sm:$0xf]
      %v248 = vld [vmem:[%s1 + $0x30] sm:$0xf]
      %v249 = vld [vmem:[%s1 + $0x34] sm:$0xf]
      %v250 = vld [vmem:[%s1 + $0x38] sm:$0xf]
      %v251 = vld [vmem:[%s1 + $0x3c] sm:$0xf]
      %v252 = vld [vmem:[%s1 + $0x40] sm:$0xf]
      %v253 = vld [vmem:[%s1 + $0x44] sm:$0xf]
      %v254 = vld [vmem:[%s1 + $0x48] sm:$0xf]
      %v255 = vld [vmem:[%s1 + $0x4c] sm:$0xf]
      %v256 = vld [vmem:[%s1 + $0x50] sm:$0xf]
      %v257 = vld [vmem:[%s1 + $0x54] sm:$0xf]
      %v258 = vld [vmem:[%s1 + $0x58] sm:$0xf]
      %v259 = vld [vmem:[%s1 + $0x5c] sm:$0xf]
      %v260 = vld [vmem:[%s1 + $0x60] sm:$0xf]
      %v261 = vld [vmem:[%s1 + $0x64] sm:$0xf]
      %v262 = vld [vmem:[%s1 + $0x68] sm:$0xf]
      %v263 = vld [vmem:[%s1 + $0x6c] sm:$0xf]
      %v264 = vld [vmem:[%s1 + $0x70] sm:$0xf]
      %v265 = vld [vmem:[%s1 + $0x74] sm:$0xf]
      %v266 = vld [vmem:[%s1 + $0x78] sm:$0xf]
      %v267 = vld [vmem:[%s1 + $0x7c] sm:$0xf]
      %v268 = vld [vmem:[%s1 + $0x80] sm:$0xf]
      %v269 = vld [vmem:[%s1 + $0x84] sm:$0xf]
      %v270 = vld [vmem:[%s1 + $0x88] sm:$0xf]
      %v271 = vld [vmem:[%s1 + $0x8c] sm:$0xf]
      %v272 = vld [vmem:[%s1 + $0x90] sm:$0xf]
      %v273 = vld [vmem:[%s1 + $0x94] sm:$0xf]
      %v274 = vld [vmem:[%s1 + $0x98] sm:$0xf]
      %v275 = vld [vmem:[%s1 + $0x9c] sm:$0xf]
      %v276 = vld [vmem:[%s1 + $0xa0] sm:$0xf]
      %v277 = vld [vmem:[%s1 + $0xa4] sm:$0xf]
      %v278 = vld [vmem:[%s1 + $0xa8] sm:$0xf]
      %v279 = vld [vmem:[%s1 + $0xac] sm:$0xf]
      %v280 = vld [vmem:[%s1 + $0xb0] sm:$0xf]
      %v281 = vld [vmem:[%s1 + $0xb4] sm:$0xf]
      %v282 = vld [vmem:[%s1 + $0xb8] sm:$0xf]
      %v283 = vld [vmem:[%s1 + $0xbc] sm:$0xf]
      %v284 = vld [vmem:[%s1 + $0xc0] sm:$0xf]
      %v285 = vld [vmem:[%s1 + $0xc4] sm:$0xf]
      %v286 = vld [vmem:[%s1 + $0xc8] sm:$0xf]
      %v287 = vld [vmem:[%s1 + $0xcc] sm:$0xf]
      %v288 = vld [vmem:[%s1 + $0xd0] sm:$0xf]
      %v289 = vld [vmem:[%s1 + $0xd4] sm:$0xf]
      %v290 = vld [vmem:[%s1 + $0xd8] sm:$0xf]
      %v291 = vld [vmem:[%s1 + $0xdc] sm:$0xf]
      %v292 = vld [vmem:[%s1 + $0xe0] sm:$0xf]
      %v293 = vld [vmem:[%s1 + $0xe4] sm:$0xf]
      %v294 = vld [vmem:[%s1 + $0xe8] sm:$0xf]
      %v295 = vld [vmem:[%s1 + $0xec] sm:$0xf]
      %v296 = vld [vmem:[%s1 + $0xf0] sm:$0xf]
      %v297 = vld [vmem:[%s1 + $0xf4] sm:$0xf]
      %v298 = vld [vmem:[%s1 + $0xf8] sm:$0xf]
      %v299 = vld [vmem:[%s1 + $0xfc] sm:$0xf]
      %v332 = vunpack.c.l.b16 %v204
      %v333 = vunpack.c.h.b16 %v204
      %v334 = vunpack.c.l.b16 %v205
      %v335 = vunpack.c.h.b16 %v205
      %v336 = vunpack.c.l.b16 %v206
      %v337 = vunpack.c.h.b16 %v206
      %v338 = vunpack.c.l.b16 %v207
      %v339 = vunpack.c.h.b16 %v207
      %v340 = vunpack.c.l.b16 %v208
      %v341 = vunpack.c.h.b16 %v208
      %v342 = vunpack.c.l.b16 %v209
      %v343 = vunpack.c.h.b16 %v209
      %v344 = vunpack.c.l.b16 %v210
      %v345 = vunpack.c.h.b16 %v210
      %v346 = vunpack.c.l.b16 %v211
      %v347 = vunpack.c.h.b16 %v211
      %v348 = vunpack.c.l.b16 %v212
      %v349 = vunpack.c.h.b16 %v212
      %v350 = vunpack.c.l.b16 %v213
      %v351 = vunpack.c.h.b16 %v213
      %v352 = vunpack.c.l.b16 %v214
      %v353 = vunpack.c.h.b16 %v214
      %v354 = vunpack.c.l.b16 %v215
      %v355 = vunpack.c.h.b16 %v215
      %v356 = vunpack.c.l.b16 %v216
      %v357 = vunpack.c.h.b16 %v216
      %v358 = vunpack.c.l.b16 %v217
      %v359 = vunpack.c.h.b16 %v217
      %v360 = vunpack.c.l.b16 %v218
      %v361 = vunpack.c.h.b16 %v218
      %v362 = vunpack.c.l.b16 %v219
      %v363 = vunpack.c.h.b16 %v219
      %v364 = vunpack.c.l.b16 %v220
      %v365 = vunpack.c.h.b16 %v220
      %v366 = vunpack.c.l.b16 %v221
      %v367 = vunpack.c.h.b16 %v221
      %v368 = vunpack.c.l.b16 %v222
      %v369 = vunpack.c.h.b16 %v222
      %v370 = vunpack.c.l.b16 %v223
      %v371 = vunpack.c.h.b16 %v223
      %v372 = vunpack.c.l.b16 %v224
      %v373 = vunpack.c.h.b16 %v224
      %v374 = vunpack.c.l.b16 %v225
      %v375 = vunpack.c.h.b16 %v225
      %v376 = vunpack.c.l.b16 %v226
      %v377 = vunpack.c.h.b16 %v226
      %v378 = vunpack.c.l.b16 %v227
      %v379 = vunpack.c.h.b16 %v227
      %v380 = vunpack.c.l.b16 %v228
      %v381 = vunpack.c.h.b16 %v228
      %v382 = vunpack.c.l.b16 %v229
      %v383 = vunpack.c.h.b16 %v229
      %v384 = vunpack.c.l.b16 %v230
      %v385 = vunpack.c.h.b16 %v230
      %v386 = vunpack.c.l.b16 %v231
      %v387 = vunpack.c.h.b16 %v231
      %v388 = vunpack.c.l.b16 %v232
      %v389 = vunpack.c.h.b16 %v232
      %v390 = vunpack.c.l.b16 %v233
      %v391 = vunpack.c.h.b16 %v233
      %v392 = vunpack.c.l.b16 %v234
      %v393 = vunpack.c.h.b16 %v234
      %v394 = vunpack.c.l.b16 %v235
      %v395 = vunpack.c.h.b16 %v235
      %v396 = vpack.c.b16 %v336, %v332
      %v397 = vpack.c.b16 %v337, %v333
      %v398 = vpack.c.b16 %v338, %v334
      %v399 = vpack.c.b16 %v339, %v335
      %v400 = vpack.c.b16 %v344, %v340
      %v401 = vpack.c.b16 %v345, %v341
      %v402 = vpack.c.b16 %v346, %v342
      %v403 = vpack.c.b16 %v347, %v343
      %v404 = vpack.c.b16 %v352, %v348
      %v405 = vpack.c.b16 %v353, %v349
      %v406 = vpack.c.b16 %v354, %v350
      %v407 = vpack.c.b16 %v355, %v351
      %v408 = vpack.c.b16 %v360, %v356
      %v409 = vpack.c.b16 %v361, %v357
      %v410 = vpack.c.b16 %v362, %v358
      %v411 = vpack.c.b16 %v363, %v359
      %v412 = vpack.c.b16 %v368, %v364
      %v413 = vpack.c.b16 %v369, %v365
      %v414 = vpack.c.b16 %v370, %v366
      %v415 = vpack.c.b16 %v371, %v367
      %v416 = vpack.c.b16 %v376, %v372
      %v417 = vpack.c.b16 %v377, %v373
      %v418 = vpack.c.b16 %v378, %v374
      %v419 = vpack.c.b16 %v379, %v375
      %v420 = vpack.c.b16 %v384, %v380
      %v421 = vpack.c.b16 %v385, %v381
      %v422 = vpack.c.b16 %v386, %v382
      %v423 = vpack.c.b16 %v387, %v383
      %v424 = vpack.c.b16 %v392, %v388
      %v425 = vpack.c.b16 %v393, %v389
      %v426 = vpack.c.b16 %v394, %v390
      %v427 = vpack.c.b16 %v395, %v391
      %v524 = vunpack.c.l.b16 %v236
      %v525 = vunpack.c.l.b16 %v237
      %v526 = vunpack.c.l.b16 %v238
      %v527 = vunpack.c.l.b16 %v239
      %v528 = vunpack.c.l.b16 %v240
      %v529 = vunpack.c.l.b16 %v241
      %v530 = vunpack.c.l.b16 %v242
      %v531 = vunpack.c.l.b16 %v243
      %v532 = vunpack.c.l.b16 %v244
      %v533 = vunpack.c.l.b16 %v245
      %v534 = vunpack.c.l.b16 %v246
      %v535 = vunpack.c.l.b16 %v247
      %v536 = vunpack.c.l.b16 %v248
      %v537 = vunpack.c.l.b16 %v249
      %v538 = vunpack.c.l.b16 %v250
      %v539 = vunpack.c.l.b16 %v251
      %v540 = vunpack.c.l.b16 %v252
      %v541 = vunpack.c.l.b16 %v253
      %v542 = vunpack.c.l.b16 %v254
      %v543 = vunpack.c.l.b16 %v255
      %v544 = vunpack.c.l.b16 %v256
      %v545 = vunpack.c.l.b16 %v257
      %v546 = vunpack.c.l.b16 %v258
      %v547 = vunpack.c.l.b16 %v259
      %v548 = vunpack.c.l.b16 %v260
      %v549 = vunpack.c.l.b16 %v261
      %v550 = vunpack.c.l.b16 %v262
      %v551 = vunpack.c.l.b16 %v263
      %v552 = vunpack.c.l.b16 %v264
      %v553 = vunpack.c.l.b16 %v265
      %v554 = vunpack.c.l.b16 %v266
      %v555 = vunpack.c.l.b16 %v267
      %v556 = vunpack.c.l.b16 %v268
      %v557 = vunpack.c.l.b16 %v269
      %v558 = vunpack.c.l.b16 %v270
      %v559 = vunpack.c.l.b16 %v271
      %v560 = vunpack.c.l.b16 %v272
      %v561 = vunpack.c.l.b16 %v273
      %v562 = vunpack.c.l.b16 %v274
      %v563 = vunpack.c.l.b16 %v275
      %v564 = vunpack.c.l.b16 %v276
      %v565 = vunpack.c.l.b16 %v277
      %v566 = vunpack.c.l.b16 %v278
      %v567 = vunpack.c.l.b16 %v279
      %v568 = vunpack.c.l.b16 %v280
      %v569 = vunpack.c.l.b16 %v281
      %v570 = vunpack.c.l.b16 %v282
      %v571 = vunpack.c.l.b16 %v283
      %v572 = vunpack.c.l.b16 %v284
      %v573 = vunpack.c.l.b16 %v285
      %v574 = vunpack.c.l.b16 %v286
      %v575 = vunpack.c.l.b16 %v287
      %v576 = vunpack.c.l.b16 %v288
      %v577 = vunpack.c.l.b16 %v289
      %v578 = vunpack.c.l.b16 %v290
      %v579 = vunpack.c.l.b16 %v291
      %v580 = vunpack.c.l.b16 %v292
      %v581 = vunpack.c.l.b16 %v293
      %v582 = vunpack.c.l.b16 %v294
      %v583 = vunpack.c.l.b16 %v295
      %v584 = vunpack.c.l.b16 %v296
      %v585 = vunpack.c.l.b16 %v297
      %v586 = vunpack.c.l.b16 %v298
      %v587 = vunpack.c.l.b16 %v299
      %v588 = vpack.c.b16 %v525, %v524
      %v589 = vpack.c.b16 %v527, %v526
      %v590 = vpack.c.b16 %v529, %v528
      %v591 = vpack.c.b16 %v531, %v530
      %v592 = vpack.c.b16 %v533, %v532
      %v593 = vpack.c.b16 %v535, %v534
      %v594 = vpack.c.b16 %v537, %v536
      %v595 = vpack.c.b16 %v539, %v538
      %v596 = vpack.c.b16 %v541, %v540
      %v597 = vpack.c.b16 %v543, %v542
      %v598 = vpack.c.b16 %v545, %v544
      %v599 = vpack.c.b16 %v547, %v546
      %v600 = vpack.c.b16 %v549, %v548
      %v601 = vpack.c.b16 %v551, %v550
      %v602 = vpack.c.b16 %v553, %v552
      %v603 = vpack.c.b16 %v555, %v554
      %v604 = vpack.c.b16 %v557, %v556
      %v605 = vpack.c.b16 %v559, %v558
      %v606 = vpack.c.b16 %v561, %v560
      %v607 = vpack.c.b16 %v563, %v562
      %v608 = vpack.c.b16 %v565, %v564
      %v609 = vpack.c.b16 %v567, %v566
      %v610 = vpack.c.b16 %v569, %v568
      %v611 = vpack.c.b16 %v571, %v570
      %v612 = vpack.c.b16 %v573, %v572
      %v613 = vpack.c.b16 %v575, %v574
      %v614 = vpack.c.b16 %v577, %v576
      %v615 = vpack.c.b16 %v579, %v578
      %v616 = vpack.c.b16 %v581, %v580
      %v617 = vpack.c.b16 %v583, %v582
      %v618 = vpack.c.b16 %v585, %v584
      %v619 = vpack.c.b16 %v587, %v586
      %652 = vmatpush.bf16.msra.mxu0 %v595
      %653 = vmatpush.bf16.msra.mxu0 %v594
      %654 = vmatpush.bf16.msra.mxu0 %v593
      %655 = vmatpush.bf16.msra.mxu0 %v592
      %656 = vmatpush.bf16.msra.mxu0 %v591
      %657 = vmatpush.bf16.msra.mxu0 %v590
      %658 = vmatpush.bf16.msra.mxu0 %v589
      %659 = vmatpush.bf16.msra.mxu0 %v588
      %660 = vmatmul.bf16.gmra.mxu0 %v396
      %v661 = vpop.f32.mrf.mxu0
      %v662 = vadd.f32 0.0, %v661
      %v663 = vpop.f32.mrf.mxu0
      %v664 = vadd.f32 0.0, %v663
      %665 = vmatmul.bf16.gmra.mxu0 %v400
      %v666 = vpop.f32.mrf.mxu0
      %v667 = vadd.f32 0.0, %v666
      %v668 = vpop.f32.mrf.mxu0
      %v669 = vadd.f32 0.0, %v668
      %670 = vmatmul.bf16.gmra.mxu0 %v404
      %v671 = vpop.f32.mrf.mxu0
      %v672 = vadd.f32 0.0, %v671
      %v673 = vpop.f32.mrf.mxu0
      %v674 = vadd.f32 0.0, %v673
      %675 = vmatmul.bf16.gmra.mxu0 %v408
      %v676 = vpop.f32.mrf.mxu0
      %v677 = vadd.f32 0.0, %v676
      %v678 = vpop.f32.mrf.mxu0
      %v679 = vadd.f32 0.0, %v678
      %680 = vmatmul.bf16.gmra.mxu0 %v412
      %v681 = vpop.f32.mrf.mxu0
      %v682 = vadd.f32 0.0, %v681
      %v683 = vpop.f32.mrf.mxu0
      %v684 = vadd.f32 0.0, %v683
      %685 = vmatmul.bf16.gmra.mxu0 %v416
      %v686 = vpop.f32.mrf.mxu0
      %v687 = vadd.f32 0.0, %v686
      %v688 = vpop.f32.mrf.mxu0
      %v689 = vadd.f32 0.0, %v688
      %690 = vmatmul.bf16.gmra.mxu0 %v420
      %v691 = vpop.f32.mrf.mxu0
      %v692 = vadd.f32 0.0, %v691
      %v693 = vpop.f32.mrf.mxu0
      %v694 = vadd.f32 0.0, %v693
      %695 = vmatmul.bf16.gmra.mxu0 %v424
      %v696 = vpop.f32.mrf.mxu0
      %v697 = vadd.f32 0.0, %v696
      %v698 = vpop.f32.mrf.mxu0
      %v699 = vadd.f32 0.0, %v698
      %700 = vdwg.mxu0
      %701 = vmatpush.bf16.msra.mxu0 %v603
      %702 = vmatpush.bf16.msra.mxu0 %v602
      %703 = vmatpush.bf16.msra.mxu0 %v601
      %704 = vmatpush.bf16.msra.mxu0 %v600
      %705 = vmatpush.bf16.msra.mxu0 %v599
      %706 = vmatpush.bf16.msra.mxu0 %v598
      %707 = vmatpush.bf16.msra.mxu0 %v597
      %708 = vmatpush.bf16.msra.mxu0 %v596
      %709 = vmatmul.bf16.gmra.mxu0 %v397
      %v710 = vpop.f32.mrf.mxu0
      %v711 = vadd.f32 %v662, %v710
      %v712 = vpop.f32.mrf.mxu0
      %v713 = vadd.f32 %v664, %v712
      %714 = vmatmul.bf16.gmra.mxu0 %v401
      %v715 = vpop.f32.mrf.mxu0
      %v716 = vadd.f32 %v667, %v715
      %v717 = vpop.f32.mrf.mxu0
      %v718 = vadd.f32 %v669, %v717
      %719 = vmatmul.bf16.gmra.mxu0 %v405
      %v720 = vpop.f32.mrf.mxu0
      %v721 = vadd.f32 %v672, %v720
      %v722 = vpop.f32.mrf.mxu0
      %v723 = vadd.f32 %v674, %v722
      %724 = vmatmul.bf16.gmra.mxu0 %v409
      %v725 = vpop.f32.mrf.mxu0
      %v726 = vadd.f32 %v677, %v725
      %v727 = vpop.f32.mrf.mxu0
      %v728 = vadd.f32 %v679, %v727
      %729 = vmatmul.bf16.gmra.mxu0 %v413
      %v730 = vpop.f32.mrf.mxu0
      %v731 = vadd.f32 %v682, %v730
      %v732 = vpop.f32.mrf.mxu0
      %v733 = vadd.f32 %v684, %v732
      %734 = vmatmul.bf16.gmra.mxu0 %v417
      %v735 = vpop.f32.mrf.mxu0
      %v736 = vadd.f32 %v687, %v735
      %v737 = vpop.f32.mrf.mxu0
      %v738 = vadd.f32 %v689, %v737
      %739 = vmatmul.bf16.gmra.mxu0 %v421
      %v740 = vpop.f32.mrf.mxu0
      %v741 = vadd.f32 %v692, %v740
      %v742 = vpop.f32.mrf.mxu0
      %v743 = vadd.f32 %v694, %v742
      %744 = vmatmul.bf16.gmra.mxu0 %v425
      %v745 = vpop.f32.mrf.mxu0
      %v746 = vadd.f32 %v697, %v745
      %v747 = vpop.f32.mrf.mxu0
      %v748 = vadd.f32 %v699, %v747
      %749 = vdwg.mxu0
      %750 = vmatpush.bf16.msra.mxu0 %v611
      %751 = vmatpush.bf16.msra.mxu0 %v610
      %752 = vmatpush.bf16.msra.mxu0 %v609
      %753 = vmatpush.bf16.msra.mxu0 %v608
      %754 = vmatpush.bf16.msra.mxu0 %v607
      %755 = vmatpush.bf16.msra.mxu0 %v606
      %756 = vmatpush.bf16.msra.mxu0 %v605
      %757 = vmatpush.bf16.msra.mxu0 %v604
      %758 = vmatmul.bf16.gmra.mxu0 %v398
      %v759 = vpop.f32.mrf.mxu0
      %v760 = vadd.f32 %v711, %v759
      %v761 = vpop.f32.mrf.mxu0
      %v762 = vadd.f32 %v713, %v761
      %763 = vmatmul.bf16.gmra.mxu0 %v402
      %v764 = vpop.f32.mrf.mxu0
      %v765 = vadd.f32 %v716, %v764
      %v766 = vpop.f32.mrf.mxu0
      %v767 = vadd.f32 %v718, %v766
      %768 = vmatmul.bf16.gmra.mxu0 %v406
      %v769 = vpop.f32.mrf.mxu0
      %v770 = vadd.f32 %v721, %v769
      %v771 = vpop.f32.mrf.mxu0
      %v772 = vadd.f32 %v723, %v771
      %773 = vmatmul.bf16.gmra.mxu0 %v410
      %v774 = vpop.f32.mrf.mxu0
      %v775 = vadd.f32 %v726, %v774
      %v776 = vpop.f32.mrf.mxu0
      %v777 = vadd.f32 %v728, %v776
      %778 = vmatmul.bf16.gmra.mxu0 %v414
      %v779 = vpop.f32.mrf.mxu0
      %v780 = vadd.f32 %v731, %v779
      %v781 = vpop.f32.mrf.mxu0
      %v782 = vadd.f32 %v733, %v781
      %783 = vmatmul.bf16.gmra.mxu0 %v418
      %v784 = vpop.f32.mrf.mxu0
      %v785 = vadd.f32 %v736, %v784
      %v786 = vpop.f32.mrf.mxu0
      %v787 = vadd.f32 %v738, %v786
      %788 = vmatmul.bf16.gmra.mxu0 %v422
      %v789 = vpop.f32.mrf.mxu0
      %v790 = vadd.f32 %v741, %v789
      %v791 = vpop.f32.mrf.mxu0
      %v792 = vadd.f32 %v743, %v791
      %793 = vmatmul.bf16.gmra.mxu0 %v426
      %v794 = vpop.f32.mrf.mxu0
      %v795 = vadd.f32 %v746, %v794
      %v796 = vpop.f32.mrf.mxu0
      %v797 = vadd.f32 %v748, %v796
      %798 = vdwg.mxu0
      %799 = vmatpush.bf16.msra.mxu0 %v619
      %800 = vmatpush.bf16.msra.mxu0 %v618
      %801 = vmatpush.bf16.msra.mxu0 %v617
      %802 = vmatpush.bf16.msra.mxu0 %v616
      %803 = vmatpush.bf16.msra.mxu0 %v615
      %804 = vmatpush.bf16.msra.mxu0 %v614
      %805 = vmatpush.bf16.msra.mxu0 %v613
      %806 = vmatpush.bf16.msra.mxu0 %v612
      %807 = vmatmul.bf16.gmra.mxu0 %v399
      %v808 = vpop.f32.mrf.mxu0
      %v809 = vadd.f32 %v760, %v808
      %v810 = vpop.f32.mrf.mxu0
      %v811 = vadd.f32 %v762, %v810
      %812 = vmatmul.bf16.gmra.mxu0 %v403
      %v813 = vpop.f32.mrf.mxu0
      %v814 = vadd.f32 %v765, %v813
      %v815 = vpop.f32.mrf.mxu0
      %v816 = vadd.f32 %v767, %v815
      %817 = vmatmul.bf16.gmra.mxu0 %v407
      %v818 = vpop.f32.mrf.mxu0
      %v819 = vadd.f32 %v770, %v818
      %v820 = vpop.f32.mrf.mxu0
      %v821 = vadd.f32 %v772, %v820
      %822 = vmatmul.bf16.gmra.mxu0 %v411
      %v823 = vpop.f32.mrf.mxu0
      %v824 = vadd.f32 %v775, %v823
      %v825 = vpop.f32.mrf.mxu0
      %v826 = vadd.f32 %v777, %v825
      %827 = vmatmul.bf16.gmra.mxu0 %v415
      %v828 = vpop.f32.mrf.mxu0
      %v829 = vadd.f32 %v780, %v828
      %v830 = vpop.f32.mrf.mxu0
      %v831 = vadd.f32 %v782, %v830
      %832 = vmatmul.bf16.gmra.mxu0 %v419
      %v833 = vpop.f32.mrf.mxu0
      %v834 = vadd.f32 %v785, %v833
      %v835 = vpop.f32.mrf.mxu0
      %v836 = vadd.f32 %v787, %v835
      %837 = vmatmul.bf16.gmra.mxu0 %v423
      %v838 = vpop.f32.mrf.mxu0
      %v839 = vadd.f32 %v790, %v838
      %v840 = vpop.f32.mrf.mxu0
      %v841 = vadd.f32 %v792, %v840
      %842 = vmatmul.bf16.gmra.mxu0 %v427
      %v843 = vpop.f32.mrf.mxu0
      %v844 = vadd.f32 %v795, %v843
      %v845 = vpop.f32.mrf.mxu0
      %v846 = vadd.f32 %v797, %v845
      %847 = vdwg.mxu0
      %v848 = vld [vmem:[%s2] sm:$0x1]
      %v850 = vperm.slane %v848, 0
      %v852 = vmul.f32 %v809, %v850
      %v853 = vmul.f32 %v811, %v850
      %v854 = vmul.f32 %v814, %v850
      %v855 = vmul.f32 %v816, %v850
      %v856 = vmul.f32 %v819, %v850
      %v857 = vmul.f32 %v821, %v850
      %v858 = vmul.f32 %v824, %v850
      %v859 = vmul.f32 %v826, %v850
      %v860 = vmul.f32 %v829, %v850
      %v861 = vmul.f32 %v831, %v850
      %v862 = vmul.f32 %v834, %v850
      %v863 = vmul.f32 %v836, %v850
      %v864 = vmul.f32 %v839, %v850
      %v865 = vmul.f32 %v841, %v850
      %v866 = vmul.f32 %v844, %v850
      %v867 = vmul.f32 %v846, %v850
      %v868 = vld [vmem:[%s3] sm:$0x1]
      %v870 = vperm.slane %v868, 0
      %v872 = vadd.f32 %v852, %v870
      %v873 = vadd.f32 %v853, %v870
      %v874 = vadd.f32 %v854, %v870
      %v875 = vadd.f32 %v855, %v870
      %v876 = vadd.f32 %v856, %v870
      %v877 = vadd.f32 %v857, %v870
      %v878 = vadd.f32 %v858, %v870
      %v879 = vadd.f32 %v859, %v870
      %v880 = vadd.f32 %v860, %v870
      %v881 = vadd.f32 %v861, %v870
      %v882 = vadd.f32 %v862, %v870
      %v883 = vadd.f32 %v863, %v870
      %v884 = vadd.f32 %v864, %v870
      %v885 = vadd.f32 %v865, %v870
      %v886 = vadd.f32 %v866, %v870
      %v887 = vadd.f32 %v867, %v870
      %v888 = vmax.f32 %v872, 0.0
      %v889 = vmax.f32 %v873, 0.0
      %v890 = vmax.f32 %v874, 0.0
      %v891 = vmax.f32 %v875, 0.0
      %v892 = vmax.f32 %v876, 0.0
      %v893 = vmax.f32 %v877, 0.0
      %v894 = vmax.f32 %v878, 0.0
      %v895 = vmax.f32 %v879, 0.0
      %v896 = vmax.f32 %v880, 0.0
      %v897 = vmax.f32 %v881, 0.0
      %v898 = vmax.f32 %v882, 0.0
      %v899 = vmax.f32 %v883, 0.0
      %v900 = vmax.f32 %v884, 0.0
      %v901 = vmax.f32 %v885, 0.0
      %v902 = vmax.f32 %v886, 0.0
      %v903 = vmax.f32 %v887, 0.0
      %904 = vst [vmem:[%s202] sm:$0xff] %v888
      %905 = vst [vmem:[%s202 + $0x8] sm:$0xff] %v889
      %906 = vst [vmem:[%s202 + $0x10] sm:$0xff] %v890
      %907 = vst [vmem:[%s202 + $0x18] sm:$0xff] %v891
      %908 = vst [vmem:[%s202 + $0x20] sm:$0xff] %v892
      %909 = vst [vmem:[%s202 + $0x28] sm:$0xff] %v893
      %910 = vst [vmem:[%s202 + $0x30] sm:$0xff] %v894
      %911 = vst [vmem:[%s202 + $0x38] sm:$0xff] %v895
      %912 = vst [vmem:[%s202 + $0x40] sm:$0xff] %v896
      %913 = vst [vmem:[%s202 + $0x48] sm:$0xff] %v897
      %914 = vst [vmem:[%s202 + $0x50] sm:$0xff] %v898
      %915 = vst [vmem:[%s202 + $0x58] sm:$0xff] %v899
      %916 = vst [vmem:[%s202 + $0x60] sm:$0xff] %v900
      %917 = vst [vmem:[%s202 + $0x68] sm:$0xff] %v901
      %918 = vst [vmem:[%s202 + $0x70] sm:$0xff] %v902
      %919 = vst [vmem:[%s202 + $0x78] sm:$0xff] %v903
      %s920 = smul.u32 16, %s15
      %p921 = scmp.lt.s32.totalorder %s920, 79
      %s922 = scalar_select %p921, %s920, 79
      %s923 = smul.addr %s922, 8
      %s924 = scalar_lea.vmem %s4, %s923
      // Predicated region
      $region37: #{deconv_block_forward.1} parent=35 // pred_check
        %p925 = pneg %p122
      $region38: #{deconv_block_forward.1} parent=35 // pred_check_branch
        %927 = sbr.rel (%p925) target = $region40
      $region39: #{deconv_block_forward.1} parent=35 // pred_region
        %s928 = smul.u32 16, %s15
      $region40: #{deconv_block_forward.1} parent=35 // pred_fallthru
        _
    $region36: #{deconv_block_forward.1} parent=5 // pred_fallthru
      _
    %p929 = scmp.le.s32.totalorder 2, %s10
    // Predicated region
    $region41: #{deconv_block_forward.1} parent=5 // pred_check
      %p930 = pneg %p929
    $region42: #{deconv_block_forward.1} parent=5 // pred_check_branch
      %932 = sbr.rel (%p930) target = $region44
    $region43: #{deconv_block_forward.1} parent=5 // pred_region
      %s933 = ssub.s32 %s10, 2
      // Predicated region
      $region45: #{deconv_block_forward.1} parent=43 // pred_check
        %p934 = pneg %p128
      $region46: #{deconv_block_forward.1} parent=43 // pred_check_branch
        %936 = sbr.rel (%p934) target = $region48
      $region47: #{deconv_block_forward.1} parent=43 // pred_region
        %s937 = smul.u32 16, %s16
        %p938 = scmp.lt.s32.totalorder %s937, 79
        %s939 = scalar_select %p938, %s937, 79
        %s940 = smul.addr %s939, 8
        %s941 = scalar_lea.vmem %s4, %s940
      $region48: #{deconv_block_forward.1} parent=43 // pred_fallthru
        _
    $region44: #{deconv_block_forward.1} parent=5 // pred_fallthru
      _
  $region6: #{deconv_block_forward.1} parent=0 // loop_footer
    %s14 = sadd.s32 1, %s10
  $region7: #{deconv_block_forward.1} parent=0 // loop_footer_branch
    %9 = sbr.rel target = $region3
  $region8: #{deconv_block_forward.1} parent=0 // loop_exit
    _

</llo_original>
